<compile_context>
chip_gen: v5e
topology: v5e:2x2
jax: 0.10.0
libtpu: 0.0.40
codegen_flags: <defaults>
</compile_context>

<pallas_src>
import math

import jax
import jax.numpy as jnp
from jax.experimental import pallas as pl
from jax.experimental.pallas import tpu as pltpu


def _pe_add_kernel_3d(x_ref, pe_ref, o_ref):
    # x_ref/o_ref: (tS, B, tD); pe_ref: (tS, tD) -> broadcast add over batch.
    pe = jnp.expand_dims(pe_ref[...], 1)          # (tS, 1, tD)
    o_ref[...] = (x_ref[...] + pe).astype(o_ref.dtype)


def _pe_add_kernel_2d(x_ref, pe_ref, o_ref):
    # Dense path for batch == 1: everything is (tS, tD).
    o_ref[...] = (x_ref[...] + pe_ref[...]).astype(o_ref.dtype)


def make_pe_table(d_model, max_len=600, dtype=jnp.float32):
    """Sinusoidal table, exactly as in PositionalEncoding.__init__.

    Built once at module init. Returns (max_len, 1, d_model) mirroring the
    PyTorch buffer layout. Pass dtype=x.dtype (e.g. bf16) to halve pe HBM
    traffic; note that then differs slightly from PyTorch's always-f32 buffer.
    """
    assert d_model % 2 == 0, "d_model must be even (same limit as the PyTorch code)"
    position = jnp.arange(max_len, dtype=jnp.float32)[:, None]            # (max_len, 1)
    div_term = jnp.exp(
        jnp.arange(0, d_model, 2, dtype=jnp.float32) * (-math.log(10000.0) / d_model)
    )                                                                      # (d_model//2,)
    angles = position * div_term                                           # (max_len, d_model//2)
    pe = jnp.zeros((max_len, d_model), dtype=jnp.float32)
    pe = pe.at[:, 0::2].set(jnp.sin(angles))
    pe = pe.at[:, 1::2].set(jnp.cos(angles))
    return pe[:, None, :].astype(dtype)


_SMALL_INPUT_ELEMS = 1 << 16            # below this, a plain fused XLA add wins


def _round_up(n, m):
    return -(-n // m) * m


def _vmem_budget_and_limit():
    """Generation-aware VMEM budget for the padded, double-buffered working set."""
    vmem_cap = 64 * 1024 * 1024         # conservative fallback (v7x per-TC VMEM)
    try:
        info = pltpu.get_tpu_info()
        cap = getattr(info, "vmem_capacity_bytes", None)
        if cap:
            vmem_cap = int(cap)
    except Exception:
        pass
    # ~48 MiB on 128 MiB parts (v5e/v6e), ~40 MiB on v7x's 64 MiB.
    budget = min(48 * 1024 * 1024, (vmem_cap * 5) // 8)
    limit = min(vmem_cap - 8 * 1024 * 1024, 100 * 1024 * 1024)
    limit = max(limit, budget + 4 * 1024 * 1024)
    return budget, limit


def _choose_tiles(S, D, itemsize, sublane_rows_per_seq, budget_bytes):
    """Pick (tS, tD) using PADDED VMEM sizes.

    sublane_rows_per_seq: padded sublane rows each x/out seq position occupies
    (round_up(B, pack) for the 3-D path, 1 for the dense 2-D path).
    """
    padded_D = _round_up(D, 128)
    min_tS = 8

    def per_row_bytes(padded_tD):
        # double-buffered (x + out + pe) bytes per seq row
        return 2 * (2 * sublane_rows_per_seq + 1) * padded_tD * itemsize

    if D <= 128 or min_tS * per_row_bytes(padded_D) <= budget_bytes:
        tD, padded_tD = D, padded_D                  # full, contiguous feature rows
    else:
        # Lane-dense non-divisor tile; masked tail block handles D % tD != 0.
        tD = (budget_bytes // (per_row_bytes(1) * min_tS)) // 128 * 128
        tD = int(max(128, min(tD, padded_D)))
        padded_tD = tD

    tS = int(max(1, budget_bytes // per_row_bytes(padded_tD)))
    tS = min(tS, S)
    if S >= 8:
        tS = max(8, (tS // 8) * 8)                   # pe sublane dim: multiple of 8
    else:
        tS = S
    return tS, tD


def positional_encoding_forward(x, pe, *, seq_tile=None, d_tile=None,
                                use_pallas=None, donate_x=False):
    """x: (S, B, D); pe: (max_len, 1, D) or (max_len, D) with max_len >= S."""
    assert x.ndim == 3, "expected (seq, batch, d_model)"
    S, B, D = x.shape
    pe2d = pe.reshape(pe.shape[0], pe.shape[-1])     # contiguity-preserving squeeze
    assert pe2d.shape[1] == D and pe2d.shape[0] >= S

    if use_pallas is None:
        use_pallas = x.size >= _SMALL_INPUT_ELEMS
    if not use_pallas:
        # Tiny tensors: a fused XLA add beats any custom-kernel launch.
        return (x + pe2d[:S][:, None, :]).astype(x.dtype)

    budget, vmem_limit = _vmem_budget_and_limit()
    itemsize = x.dtype.itemsize
    pack = max(8, 32 // itemsize)                    # sublane packing: f32->8, bf16->16, i8->32

    squeeze_batch = (B == 1)
    b_rows = 1 if squeeze_batch else _round_up(B, pack)

    tS, tD = _choose_tiles(S, D, itemsize, b_rows, budget)
    auto = seq_tile is None and d_tile is None
    if seq_tile is not None:
        tS = seq_tile
    if d_tile is not None:
        tD = d_tile
    if auto and S >= 16 and pl.cdiv(S, tS) * pl.cdiv(D, tD) < 2:
        # >= 2 grid steps split along seq: both v7x TensorCores get work while
        # each still writes full-D, contiguous output slabs.
        tS = _round_up(pl.cdiv(S, 2), 8)
    grid = (pl.cdiv(S, tS), pl.cdiv(D, tD))

    # pe's first block dim is sublane-tiled; keep it a multiple of 8, otherwise
    # (tiny forced-Pallas S) slice so the block spans pe's full first dim.
    pe_arg = pe2d if tS % 8 == 0 else pe2d[:S]

    cost = pl.CostEstimate(
        flops=S * B * D,
        transcendentals=0,
        bytes_accessed=2 * S * B * D * itemsize + S * D * pe_arg.dtype.itemsize,
    )
    compiler_params = pltpu.CompilerParams(
        dimension_semantics=("parallel", "parallel"),
        vmem_limit_bytes=int(vmem_limit),
    )
    io_alias = {0: 0} if donate_x else {}
    pe_spec = pl.BlockSpec((tS, tD), lambda i, j: (i, j))

    if squeeze_batch:
        # B == 1: dense 2-D layout (no wasted sublanes, contiguous DMA).
        x2 = x.reshape(S, D)
        out2 = pl.pallas_call(
            _pe_add_kernel_2d,
            out_shape=jax.ShapeDtypeStruct((S, D), x.dtype),
            grid_spec=pltpu.PrefetchScalarGridSpec(
                num_scalar_prefetch=0,
                grid=grid,
                in_specs=[pl.BlockSpec((tS, tD), lambda i, j: (i, j)), pe_spec],
                out_specs=pl.BlockSpec((tS, tD), lambda i, j: (i, j)),
            ),
            compiler_params=compiler_params,
            cost_estimate=cost,
            input_output_aliases=io_alias,
        )(x2, pe_arg)
        return out2.reshape(S, B, D)

    return pl.pallas_call(
        _pe_add_kernel_3d,
        out_shape=jax.ShapeDtypeStruct((S, B, D), x.dtype),
        grid_spec=pltpu.PrefetchScalarGridSpec(
            num_scalar_prefetch=0,
            grid=grid,
            in_specs=[
                pl.BlockSpec((tS, B, tD), lambda i, j: (i, 0, j)),
                pe_spec,   # pe passed whole and 2-D; only blocks covering [0, S) are read
            ],
            out_specs=pl.BlockSpec((tS, B, tD), lambda i, j: (i, 0, j)),
        ),
        compiler_params=compiler_params,
        cost_estimate=cost,
        input_output_aliases=io_alias,
    )(x, pe_arg)


if __name__ == "__main__":
    # --- Small shape consistent with the module (forced through Pallas). ---
    d_model = 32
    max_len = 600
    seq_len = 8
    batch = 2

    key = jax.random.PRNGKey(0)
    x = jax.random.normal(key, (seq_len, batch, d_model), dtype=jnp.float32)
    pe = make_pe_table(d_model, max_len=max_len, dtype=x.dtype)

    out = jax.block_until_ready(positional_encoding_forward(x, pe, use_pallas=True))
    ref = x + pe[:seq_len]
    assert out.shape == x.shape and out.dtype == x.dtype
    assert jnp.allclose(out, ref, atol=1e-6, rtol=1e-6)

    # Auto path (small input -> plain JAX bypass) must match too.
    out_auto = jax.block_until_ready(positional_encoding_forward(x, pe))
    assert jnp.allclose(out_auto, ref, atol=1e-6, rtol=1e-6)

    # --- Lane-dense tiled path (forces >= 2 seq grid steps). ---
    s2, b2, d2 = 64, 8, 256
    x2 = jax.random.normal(jax.random.PRNGKey(0), (s2, b2, d2), dtype=jnp.float32)
    pe2 = make_pe_table(d2, max_len=max_len, dtype=x2.dtype)
    out2 = jax.block_until_ready(positional_encoding_forward(x2, pe2, use_pallas=True))
    assert out2.shape == x2.shape and out2.dtype == x2.dtype
    assert jnp.allclose(out2, x2 + pe2[:s2], atol=1e-6, rtol=1e-6)

    # --- B == 1: dense 2-D path. ---
    s3, d3 = 32, 128
    x3 = jax.random.normal(jax.random.PRNGKey(0), (s3, 1, d3), dtype=jnp.float32)
    pe3 = make_pe_table(d3, max_len=max_len, dtype=x3.dtype)
    out3 = jax.block_until_ready(positional_encoding_forward(x3, pe3, use_pallas=True))
    assert out3.shape == x3.shape
    assert jnp.allclose(out3, x3 + pe3[:s3], atol=1e-6, rtol=1e-6)

    # --- Non-divisor feature tile (masked tail block along D). ---
    s4, b4, d4 = 16, 4, 384
    x4 = jax.random.normal(jax.random.PRNGKey(0), (s4, b4, d4), dtype=jnp.float32)
    pe4 = make_pe_table(d4, max_len=max_len, dtype=x4.dtype)
    out4 = jax.block_until_ready(
        positional_encoding_forward(x4, pe4, use_pallas=True, d_tile=256))
    assert jnp.allclose(out4, x4 + pe4[:s4], atol=1e-6, rtol=1e-6)

    print("KERNEL_OK")
</pallas_src>

<mosaic_0001>
module attributes {stable_mosaic.version = 11 : i64} {
  func.func @_pe_add_kernel_3d(%arg0: i32, %arg1: i32, %arg2: memref<8x2x32xf32, #tpu.memory_space<vmem>>, %arg3: memref<8x32xf32, #tpu.memory_space<vmem>>, %arg4: memref<8x2x32xf32, #tpu.memory_space<vmem>>) attributes {dimension_semantics = [#tpu.dimension_semantics<parallel>, #tpu.dimension_semantics<parallel>], iteration_bounds = array<i64: 1, 1>, scalar_prefetch = 0 : i64, scratch_operands = 0 : i64, tpu.core_type = #tpu.core_type<tc>, window_params = [{transform_indices = @transform_0, window_bounds = array<i64: 8, 2, 32>}, {transform_indices = @transform_1, window_bounds = array<i64: 8, 32>}, {transform_indices = @transform_2, window_bounds = array<i64: 8, 2, 32>}]} {
    %c0 = arith.constant 0 : index
    %c0_0 = arith.constant 0 : index
    %0 = vector.load %arg3[%c0, %c0_0] : memref<8x32xf32, #tpu.memory_space<vmem>>, vector<8x32xf32>
    %1 = vector.shape_cast %0 : vector<8x32xf32> to vector<8x1x32xf32>
    %c0_1 = arith.constant 0 : index
    %c0_2 = arith.constant 0 : index
    %c0_3 = arith.constant 0 : index
    %2 = vector.load %arg2[%c0_1, %c0_2, %c0_3] : memref<8x2x32xf32, #tpu.memory_space<vmem>>, vector<8x2x32xf32>
    %3 = vector.broadcast %1 : vector<8x1x32xf32> to vector<8x2x32xf32>
    %4 = arith.addf %2, %3 : vector<8x2x32xf32>
    %c0_4 = arith.constant 0 : index
    %c0_5 = arith.constant 0 : index
    %c0_6 = arith.constant 0 : index
    %5 = vector.load %arg4[%c0_4, %c0_5, %c0_6] : memref<8x2x32xf32, #tpu.memory_space<vmem>>, vector<8x2x32xf32>
    tpu.vector_store %arg4[%c0_4, %c0_5, %c0_6], %4 {strides = array<i32>} : memref<8x2x32xf32, #tpu.memory_space<vmem>>, vector<8x2x32xf32>,
    return
  }
  func.func @transform_0(%arg0: i32, %arg1: i32) -> (i32, i32, i32) {
    %c0_i32 = arith.constant 0 : i32
    %c0_i32_0 = arith.constant 0 : i32
    return %arg0, %c0_i32, %arg1 : i32, i32, i32
  }
  func.func @transform_1(%arg0: i32, %arg1: i32) -> (i32, i32) {
    %c0_i32 = arith.constant 0 : i32
    return %arg0, %arg1 : i32, i32
  }
  func.func @transform_2(%arg0: i32, %arg1: i32) -> (i32, i32, i32) {
    %c0_i32 = arith.constant 0 : i32
    %c0_i32_0 = arith.constant 0 : i32
    return %arg0, %c0_i32, %arg1 : i32, i32, i32
  }
}

</mosaic_0001>

<llo_original>
// kernel: tpu_custom_call.1
$region0: #{tpu_custom_call.1}
  #allocation0 [shape = 'u32[]', space=smem, size = 0x4, offset = 0x4, fixed_abs, tag = 'smem constant byte address 0x4 - core index']
  #allocation1 [shape = 'u32[72,128]{1,0:T(1,128)}', space=vmem, size = 0x9000, scoped, tag = 'internal scratch']
  %s0 = inlined_call_operand.vmem [shape: f32[8,2,32], index: 0, kind: input, shape index: {}]
  %s1 = inlined_call_operand.vmem [shape: f32[600,32], index: 1, kind: input, shape index: {}]
  %s2 = inlined_call_operand.hbm [shape: f32[8,2,32], index: 2, kind: output, shape index: {}]
  %s3 = sld [smem:[#allocation0]]
  $region18: #{tpu_custom_call.1} parent=0
    _
  %s5 = ssub.s32 1, %s3
  %s6 = scalar_select 0, %s5, %s3
  $region1: #{tpu_custom_call.1} parent=0
    #allocation2 [shape = 'u8[8192]{0}', space=vmem, size = 0x2000, scoped, tag = 'output window, operand 0, single buffered']
    #allocation3 [shape = 's32[1]{0}', space=sflag, size = 0x4, scoped, tag = 'scoped memory for tpu_custom_call.1']
    %7 = vsyncpa [#allocation3], 0
    // Predicated region
    $region2: #{tpu_custom_call.1} parent=1 // pred_check
      _
    $region3: #{tpu_custom_call.1} parent=1 // pred_check_branch
      %9 = sbr.rel (0) target = $region5
    $region4: #{tpu_custom_call.1} parent=1 // pred_region
      _
    $region5: #{tpu_custom_call.1} parent=1 // pred_fallthru
      _
    // Predicated region
    $region6: #{tpu_custom_call.1} parent=1 // pred_check
      _
    $region7: #{tpu_custom_call.1} parent=1 // pred_check_branch
      %11 = sbr.rel (0) target = $region9
    $region8: #{tpu_custom_call.1} parent=1 // pred_region
      _
    $region9: #{tpu_custom_call.1} parent=1 // pred_fallthru
      _
    %v12 = vld [vmem:[%s1] sm:$0xff]
    %v14 = vrot.slane %v12, 1
    %v15 = vrot.slane %v12, 2
    %v16 = vrot.slane %v12, 3
    %v17 = vrot.slane %v12, 4
    %v18 = vrot.slane %v12, 5
    %v19 = vrot.slane %v12, 6
    %v20 = vrot.slane %v12, 7
    %v21 = vld [vmem:[%s0] sm:$0x3]
    %v22 = vld [vmem:[%s0 + $0x2] sm:$0x3]
    %v23 = vld [vmem:[%s0 + $0x4] sm:$0x3]
    %v24 = vld [vmem:[%s0 + $0x6] sm:$0x3]
    %v25 = vld [vmem:[%s0 + $0x8] sm:$0x3]
    %v26 = vld [vmem:[%s0 + $0xa] sm:$0x3]
    %v27 = vld [vmem:[%s0 + $0xc] sm:$0x3]
    %v28 = vld [vmem:[%s0 + $0xe] sm:$0x3]
    %v29 = vperm.slane %v12, 0
    %v30 = vperm.slane %v14, 0
    %v31 = vperm.slane %v15, 0
    %v32 = vperm.slane %v16, 0
    %v33 = vperm.slane %v17, 0
    %v34 = vperm.slane %v18, 0
    %v35 = vperm.slane %v19, 0
    %v36 = vperm.slane %v20, 0
    %v45 = vadd.f32 %v21, %v29
    %v46 = vadd.f32 %v22, %v30
    %v47 = vadd.f32 %v23, %v31
    %v48 = vadd.f32 %v24, %v32
    %v49 = vadd.f32 %v25, %v33
    %v50 = vadd.f32 %v26, %v34
    %v51 = vadd.f32 %v27, %v35
    %v52 = vadd.f32 %v28, %v36
    %vm53 = vcmask 254976
    %54 = vst.msk [vmem:[#allocation2] sm:$0x3] %vm53, %v45
    %55 = vst.msk [vmem:[#allocation2 + $0x2] sm:$0x3] %vm53, %v46
    %56 = vst.msk [vmem:[#allocation2 + $0x4] sm:$0x3] %vm53, %v47
    %57 = vst.msk [vmem:[#allocation2 + $0x6] sm:$0x3] %vm53, %v48
    %58 = vst.msk [vmem:[#allocation2 + $0x8] sm:$0x3] %vm53, %v49
    %59 = vst.msk [vmem:[#allocation2 + $0xa] sm:$0x3] %vm53, %v50
    %60 = vst.msk [vmem:[#allocation2 + $0xc] sm:$0x3] %vm53, %v51
    %61 = vst.msk [vmem:[#allocation2 + $0xe] sm:$0x3] %vm53, %v52
    // Predicated region
    $region10: #{tpu_custom_call.1} parent=1 // pred_check
      _
    $region11: #{tpu_custom_call.1} parent=1 // pred_check_branch
      %63 = sbr.rel (0) target = $region13
    $region12: #{tpu_custom_call.1} parent=1 // pred_region
      %65 = vsyncadd [#allocation3], 0
      %s66 = sshll.u32 [#allocation2], 4
      %s67 = int_to_ptr.vmem [resolvable:$true] %s66
      %s68 = sshll.u32 %s2, 4
      %s69 = int_to_ptr.hbm [resolvable:$true] %s68
      %74 = dma.vmem_to_hbm [thread:$0]  %s67, 256, %s69, [#allocation3], 32, 32, 2
    $region13: #{tpu_custom_call.1} parent=1 // pred_fallthru
      _
    // Predicated region
    $region14: #{tpu_custom_call.1} parent=1 // pred_check
      _
    $region15: #{tpu_custom_call.1} parent=1 // pred_check_branch
      %76 = sbr.rel (0) target = $region17
    $region16: #{tpu_custom_call.1} parent=1 // pred_region
      %78 = dma.done [#allocation3], 256
    $region17: #{tpu_custom_call.1} parent=1 // pred_fallthru
      _
    %79 = vsyncpa [#allocation3], 1

</llo_original>
